<compile_context>
chip_gen: v7x
topology: tpu7x:2x2x1
jax: 0.10.0
libtpu: 0.0.40
codegen_flags: <defaults>
</compile_context>

<pallas_src>
import functools

import jax
import jax.numpy as jnp
from jax import lax
from jax.experimental import pallas as pl
from jax.experimental.pallas import tpu as pltpu

IGNORE_LB = 255

TARGET_LOGITS_BYTES = 2 * 1024 * 1024    # logits DMA'd per grid step
VMEM_BUDGET_BYTES = 20 * 1024 * 1024     # blocks + temporaries budget (v7x-safe)
VMEM_LIMIT_BYTES = 32 * 1024 * 1024      # explicit scoped-VMEM limit


def _round_up(x, m):
    return ((x + m - 1) // m) * m


def _pick_tile(n, c, hw, logit_bytes, label_bytes):
    """Pixel-tile (lane) size: big enough to amortize per-step overhead,
    small enough for double-buffered blocks + f32 temporaries to fit VMEM,
    and leaving >= 2 grid steps for v7x's two TensorCores when possible."""
    hw128 = _round_up(hw, 128)
    tile = max(128, (TARGET_LOGITS_BYTES // (n * c * logit_bytes)) // 128 * 128)
    # bytes per pixel lane: 2x-buffered logits + labels blocks, ~4x f32 temps
    # (x_f32, e, class iota, select temps) and the keep/lane-iota masks.
    per_lane = n * c * (2 * logit_bytes + 16) + 2 * n * label_bytes + 8
    cap = max(128, (VMEM_BUDGET_BYTES // per_lane) // 128 * 128)
    tile = min(tile, cap, hw128)
    if pl.cdiv(hw, tile) < 2 and hw128 >= 256:
        tile = max(128, (hw128 // 2) // 128 * 128)
    return tile


def _focal_kernel(gamma, ignore_lb, hw,
                  logits_ref, labels_ref, loss_sum_ref, count_ref):
    """One (N, C, T) pixel slab -> partial loss sum + valid-pixel count."""
    x = logits_ref[...].astype(jnp.float32)                 # (N, C, T)
    lbl = labels_ref[...].astype(jnp.int32)                 # (N, 1, T)
    n, c, t = x.shape

    # Mask the ragged tail of the (possibly partial) last block: lanes past
    # the true H*W contain unspecified data and must not contribute.
    j = pl.program_id(0)
    lane = lax.broadcasted_iota(jnp.int32, (n, 1, t), 2)
    in_bounds = (j * t + lane) < hw                          # (N, 1, T)
    keep = jnp.logical_and(in_bounds, lbl != ignore_lb)

    # Numerically stable softmax pieces along the class (sublane) axis.
    m = jnp.max(x, axis=1, keepdims=True)                    # (N, 1, T)
    e = jnp.exp(x - m)                                       # (N, C, T)
    sum_e = jnp.sum(e, axis=1, keepdims=True)                # (N, 1, T)

    # Per-pixel gather of the label class via class-iota compare + masked sum.
    cls = lax.broadcasted_iota(jnp.int32, x.shape, 1)
    safe_lbl = jnp.where(lbl == ignore_lb, 0, lbl)
    onehot = cls == safe_lbl
    picked_x = jnp.sum(jnp.where(onehot, x, 0.0), axis=1, keepdims=True)
    picked_e = jnp.sum(jnp.where(onehot, e, 0.0), axis=1, keepdims=True)

    logp = (picked_x - m) - jnp.log(sum_e)                   # exact log p_label
    p = picked_e * pl.reciprocal(sum_e, approx=True)         # reuse e: no 2nd exp
    one_minus_p = jnp.maximum(1.0 - p, 0.0)

    # focal factor (1 - p)^gamma; gamma is a static Python number.
    if float(gamma) == int(gamma):
        focal = lax.integer_pow(one_minus_p, int(gamma))
    else:
        tiny = jnp.float32(1e-30)
        focal = jnp.exp(gamma * jnp.log(jnp.maximum(one_minus_p, tiny)))

    loss = jnp.where(keep, -focal * logp, 0.0)               # (N, 1, T)

    # In-kernel partial reductions (f32), written as lane-dense 128-wide blocks.
    loss_tot = jnp.sum(jnp.sum(loss, axis=0, keepdims=True),
                       axis=2, keepdims=True)                # (1, 1, 1)
    cnt_tot = jnp.sum(jnp.sum(keep.astype(jnp.float32), axis=0, keepdims=True),
                      axis=2, keepdims=True)                 # (1, 1, 1)
    loss_sum_ref[...] = jnp.broadcast_to(loss_tot, loss_sum_ref.shape)
    count_ref[...] = jnp.broadcast_to(cnt_tot, count_ref.shape)


@functools.partial(jax.jit, static_argnames=("gamma", "ignore_lb"))
def softmax_focal_loss(logits, labels, *, gamma, ignore_lb=IGNORE_LB):
    """Forward pass of SoftmaxFocalLoss (NLL mean over non-ignored pixels)."""
    N, C, H, W = logits.shape
    HW = H * W

    # Free reshapes only: no transpose, no pad, no dtype copy of big tensors.
    x = logits.reshape(N, C, HW)        # keep caller dtype (bf16 stays bf16)
    lbl = labels.reshape(N, 1, HW)      # keep caller dtype (uint8 -> 1 B/pixel)

    tile = _pick_tile(N, C, HW, x.dtype.itemsize, lbl.dtype.itemsize)
    grid_p = pl.cdiv(HW, tile)

    loss_parts, count_parts = pl.pallas_call(
        functools.partial(_focal_kernel, gamma, ignore_lb, HW),
        out_shape=(
            jax.ShapeDtypeStruct((grid_p, 1, 128), jnp.float32),
            jax.ShapeDtypeStruct((grid_p, 1, 128), jnp.float32),
        ),
        grid_spec=pltpu.PrefetchScalarGridSpec(
            num_scalar_prefetch=0,
            grid=(grid_p,),
            in_specs=[
                # class dim at its real size (== full array dim), pixels lane-dense
                pl.BlockSpec((N, C, tile), lambda j: (0, 0, j)),
                pl.BlockSpec((N, 1, tile), lambda j: (0, 0, j)),
            ],
            out_specs=[
                pl.BlockSpec((1, 1, 128), lambda j: (j, 0, 0)),
                pl.BlockSpec((1, 1, 128), lambda j: (j, 0, 0)),
            ],
        ),
        compiler_params=pltpu.CompilerParams(
            dimension_semantics=("parallel",),
            vmem_limit_bytes=VMEM_LIMIT_BYTES),
    )(x, lbl)

    total = jnp.sum(loss_parts[:, 0, 0])
    count = jnp.sum(count_parts[:, 0, 0])
    # NOTE: if every pixel is ignored this is 0/0 -> NaN, same as PyTorch.
    return total / count


def _reference(logits, labels, gamma, ignore_lb=IGNORE_LB):
    """Pure-jnp reference of the PyTorch module, for a sanity check."""
    x = logits.astype(jnp.float32)
    logp = jax.nn.log_softmax(x, axis=1)                     # (N, C, H, W)
    p = jnp.exp(logp)
    weighted = jnp.power(1.0 - p, gamma) * logp
    safe = jnp.where(labels == ignore_lb, 0, labels).astype(jnp.int32)
    picked = jnp.take_along_axis(weighted, safe[:, None], axis=1)[:, 0]
    valid = labels != ignore_lb
    total = jnp.sum(jnp.where(valid, -picked, 0.0))
    return total / jnp.sum(valid).astype(jnp.float32)


if __name__ == "__main__":
    key = jax.random.PRNGKey(0)
    k1, k2, k3, k4, k5, k6 = jax.random.split(key, 6)

    # Case 1: module-scale shapes, integer gamma.
    N, C, H, W = 2, 4, 16, 16
    gamma = 2.0
    logits = jax.random.normal(k1, (N, C, H, W), dtype=jnp.float32) * 2.0
    labels = jax.random.randint(k2, (N, H, W), 0, C, dtype=jnp.int32)
    ign = jax.random.bernoulli(k3, 0.1, (N, H, W))
    labels = jnp.where(ign, IGNORE_LB, labels).astype(jnp.uint8)   # narrow labels

    out = jax.block_until_ready(softmax_focal_loss(logits, labels, gamma=gamma))
    ref = _reference(logits, labels, gamma)
    # approx reciprocal in the focal factor -> allow ~1e-3 relative slack
    assert jnp.allclose(out, ref, rtol=2e-3, atol=1e-6), (out, ref)

    # Case 2: ragged H*W (not a multiple of 128) + non-integer gamma; exercises
    # the in-kernel tail masking (no host-side padding anywhere).
    N2, C2, H2, W2 = 2, 4, 13, 11
    gamma2 = 1.5
    logits2 = jax.random.normal(k4, (N2, C2, H2, W2), dtype=jnp.float32)
    labels2 = jax.random.randint(k5, (N2, H2, W2), 0, C2, dtype=jnp.int32)
    ign2 = jax.random.bernoulli(k6, 0.15, (N2, H2, W2))
    labels2 = jnp.where(ign2, IGNORE_LB, labels2).astype(jnp.uint8)

    out2 = jax.block_until_ready(
        softmax_focal_loss(logits2, labels2, gamma=gamma2))
    ref2 = _reference(logits2, labels2, gamma2)
    assert jnp.allclose(out2, ref2, rtol=2e-3, atol=1e-6), (out2, ref2)

    print("KERNEL_OK")
</pallas_src>

<mosaic_0001>
module attributes {stable_mosaic.version = 11 : i64} {
  func.func @_focal_kernel(%arg0: i32, %arg1: memref<2x4x128xf32, #tpu.memory_space<vmem>>, %arg2: memref<2x1x128xi8, #tpu.memory_space<vmem>>, %arg3: memref<1x1x128xf32, #tpu.memory_space<vmem>>, %arg4: memref<1x1x128xf32, #tpu.memory_space<vmem>>) attributes {dimension_semantics = [#tpu.dimension_semantics<parallel>], iteration_bounds = array<i64: 2>, scalar_prefetch = 0 : i64, scratch_operands = 0 : i64, tpu.core_type = #tpu.core_type<tc>, window_params = [{transform_indices = @transform_0, window_bounds = array<i64: 2, 4, 128>}, {transform_indices = @transform_1, window_bounds = array<i64: 2, 1, 128>}, {transform_indices = @transform_2, window_bounds = array<i64: 1, 1, 128>}, {transform_indices = @transform_3, window_bounds = array<i64: 1, 1, 128>}]} {
    %c0 = arith.constant 0 : index
    %c0_0 = arith.constant 0 : index
    %c0_1 = arith.constant 0 : index
    %0 = vector.load %arg1[%c0, %c0_0, %c0_1] : memref<2x4x128xf32, #tpu.memory_space<vmem>>, vector<2x4x128xf32>
    %c0_2 = arith.constant 0 : index
    %c0_3 = arith.constant 0 : index
    %c0_4 = arith.constant 0 : index
    %1 = vector.load %arg2[%c0_2, %c0_3, %c0_4] : memref<2x1x128xi8, #tpu.memory_space<vmem>>, vector<2x1x128xi8>
    %2 = arith.extui %1 : vector<2x1x128xi8> to vector<2x1x128xi32>
    %3 = tpu.iota {dimensions = array<i32: 2>} : vector<2x1x128xi32>
    %c128_i32 = arith.constant 128 : i32
    %4 = arith.muli %arg0, %c128_i32 : i32
    %5 = vector.broadcast %4 : i32 to vector<2x1x128xi32>
    %6 = arith.addi %5, %3 : vector<2x1x128xi32>
    %c256_i32 = arith.constant 256 : i32
    %7 = vector.broadcast %c256_i32 : i32 to vector<2x1x128xi32>
    %8 = arith.cmpi slt, %6, %7 : vector<2x1x128xi32>
    %c255_i32 = arith.constant 255 : i32
    %9 = vector.broadcast %c255_i32 : i32 to vector<2x1x128xi32>
    %10 = arith.cmpi ne, %2, %9 : vector<2x1x128xi32>
    %11 = arith.andi %8, %10 : vector<2x1x128xi1>
    %cst = arith.constant dense<0xFF800000> : vector<2x128xf32>
    %12 = vector.multi_reduction <maximumf>, %0, %cst [1] : vector<2x4x128xf32> to vector<2x128xf32>
    %13 = vector.shape_cast %12 : vector<2x128xf32> to vector<2x1x128xf32>
    %14 = vector.broadcast %13 : vector<2x1x128xf32> to vector<2x4x128xf32>
    %15 = arith.subf %0, %14 : vector<2x4x128xf32>
    %16 = math.exp %15 : vector<2x4x128xf32>
    %cst_5 = arith.constant dense<0.000000e+00> : vector<2x128xf32>
    %17 = vector.multi_reduction <add>, %16, %cst_5 [1] : vector<2x4x128xf32> to vector<2x128xf32>
    %18 = vector.shape_cast %17 : vector<2x128xf32> to vector<2x1x128xf32>
    %19 = tpu.iota {dimensions = array<i32: 1>} : vector<2x4x128xi32>
    %c255_i32_6 = arith.constant 255 : i32
    %20 = vector.broadcast %c255_i32_6 : i32 to vector<2x1x128xi32>
    %21 = arith.cmpi eq, %2, %20 : vector<2x1x128xi32>
    %c0_i32 = arith.constant 0 : i32
    %22 = vector.broadcast %c0_i32 : i32 to vector<2x1x128xi32>
    %23 = arith.select %21, %22, %2 : vector<2x1x128xi1>, vector<2x1x128xi32>
    %24 = vector.broadcast %23 : vector<2x1x128xi32> to vector<2x4x128xi32>
    %25 = arith.cmpi eq, %19, %24 : vector<2x4x128xi32>
    %cst_7 = arith.constant 0.000000e+00 : f32
    %26 = vector.broadcast %cst_7 : f32 to vector<2x4x128xf32>
    %27 = arith.select %25, %0, %26 : vector<2x4x128xi1>, vector<2x4x128xf32>
    %cst_8 = arith.constant dense<0.000000e+00> : vector<2x128xf32>
    %28 = vector.multi_reduction <add>, %27, %cst_8 [1] : vector<2x4x128xf32> to vector<2x128xf32>
    %29 = vector.shape_cast %28 : vector<2x128xf32> to vector<2x1x128xf32>
    %cst_9 = arith.constant 0.000000e+00 : f32
    %30 = vector.broadcast %cst_9 : f32 to vector<2x4x128xf32>
    %31 = arith.select %25, %16, %30 : vector<2x4x128xi1>, vector<2x4x128xf32>
    %cst_10 = arith.constant dense<0.000000e+00> : vector<2x128xf32>
    %32 = vector.multi_reduction <add>, %31, %cst_10 [1] : vector<2x4x128xf32> to vector<2x128xf32>
    %33 = vector.shape_cast %32 : vector<2x128xf32> to vector<2x1x128xf32>
    %34 = arith.subf %29, %13 : vector<2x1x128xf32>
    %35 = math.log %18 : vector<2x1x128xf32>
    %36 = arith.subf %34, %35 : vector<2x1x128xf32>
    %37 = tpu.reciprocal %18 {approx = true} : vector<2x1x128xf32> -> vector<2x1x128xf32>
    %38 = arith.mulf %33, %37 : vector<2x1x128xf32>
    %cst_11 = arith.constant 1.000000e+00 : f32
    %39 = vector.broadcast %cst_11 : f32 to vector<2x1x128xf32>
    %40 = arith.subf %39, %38 : vector<2x1x128xf32>
    %cst_12 = arith.constant 0.000000e+00 : f32
    %41 = vector.broadcast %cst_12 : f32 to vector<2x1x128xf32>
    %42 = arith.maximumf %40, %41 : vector<2x1x128xf32>
    %43 = arith.mulf %42, %42 : vector<2x1x128xf32>
    %cst_13 = arith.constant 0.000000e+00 : f32
    %44 = vector.broadcast %cst_13 : f32 to vector<2x1x128xf32>
    %45 = arith.subf %44, %43 : vector<2x1x128xf32>
    %46 = arith.mulf %45, %36 : vector<2x1x128xf32>
    %cst_14 = arith.constant 0.000000e+00 : f32
    %47 = vector.broadcast %cst_14 : f32 to vector<2x1x128xf32>
    %48 = arith.select %11, %46, %47 : vector<2x1x128xi1>, vector<2x1x128xf32>
    %cst_15 = arith.constant dense<0.000000e+00> : vector<1x128xf32>
    %49 = vector.multi_reduction <add>, %48, %cst_15 [0] : vector<2x1x128xf32> to vector<1x128xf32>
    %50 = vector.shape_cast %49 : vector<1x128xf32> to vector<1x1x128xf32>
    %cst_16 = arith.constant dense<0.000000e+00> : vector<1x1xf32>
    %51 = vector.multi_reduction <add>, %50, %cst_16 [2] : vector<1x1x128xf32> to vector<1x1xf32>
    %52 = vector.shape_cast %51 : vector<1x1xf32> to vector<1x1x1xf32>
    %53 = arith.extui %11 : vector<2x1x128xi1> to vector<2x1x128xi32>
    %54 = arith.sitofp %53 : vector<2x1x128xi32> to vector<2x1x128xf32>
    %cst_17 = arith.constant dense<0.000000e+00> : vector<1x128xf32>
    %55 = vector.multi_reduction <add>, %54, %cst_17 [0] : vector<2x1x128xf32> to vector<1x128xf32>
    %56 = vector.shape_cast %55 : vector<1x128xf32> to vector<1x1x128xf32>
    %cst_18 = arith.constant dense<0.000000e+00> : vector<1x1xf32>
    %57 = vector.multi_reduction <add>, %56, %cst_18 [2] : vector<1x1x128xf32> to vector<1x1xf32>
    %58 = vector.shape_cast %57 : vector<1x1xf32> to vector<1x1x1xf32>
    %59 = vector.shape_cast %52 : vector<1x1x1xf32> to vector<1x1x1xf32>
    %60 = vector.broadcast %59 : vector<1x1x1xf32> to vector<1x1x128xf32>
    %c0_19 = arith.constant 0 : index
    %c0_20 = arith.constant 0 : index
    %c0_21 = arith.constant 0 : index
    %61 = vector.load %arg3[%c0_19, %c0_20, %c0_21] : memref<1x1x128xf32, #tpu.memory_space<vmem>>, vector<1x1x128xf32>
    tpu.vector_store %arg3[%c0_19, %c0_20, %c0_21], %60 {strides = array<i32>} : memref<1x1x128xf32, #tpu.memory_space<vmem>>, vector<1x1x128xf32>,
    %62 = vector.shape_cast %58 : vector<1x1x1xf32> to vector<1x1x1xf32>
    %63 = vector.broadcast %62 : vector<1x1x1xf32> to vector<1x1x128xf32>
    %c0_22 = arith.constant 0 : index
    %c0_23 = arith.constant 0 : index
    %c0_24 = arith.constant 0 : index
    %64 = vector.load %arg4[%c0_22, %c0_23, %c0_24] : memref<1x1x128xf32, #tpu.memory_space<vmem>>, vector<1x1x128xf32>
    tpu.vector_store %arg4[%c0_22, %c0_23, %c0_24], %63 {strides = array<i32>} : memref<1x1x128xf32, #tpu.memory_space<vmem>>, vector<1x1x128xf32>,
    return
  }
  func.func @transform_0(%arg0: i32) -> (i32, i32, i32) {
    %c0_i32 = arith.constant 0 : i32
    %c0_i32_0 = arith.constant 0 : i32
    %c0_i32_1 = arith.constant 0 : i32
    return %c0_i32, %c0_i32_0, %arg0 : i32, i32, i32
  }
  func.func @transform_1(%arg0: i32) -> (i32, i32, i32) {
    %c0_i32 = arith.constant 0 : i32
    %c0_i32_0 = arith.constant 0 : i32
    %c0_i32_1 = arith.constant 0 : i32
    return %c0_i32, %c0_i32_0, %arg0 : i32, i32, i32
  }
  func.func @transform_2(%arg0: i32) -> (i32, i32, i32) {
    %c0_i32 = arith.constant 0 : i32
    %c0_i32_0 = arith.constant 0 : i32
    %c0_i32_1 = arith.constant 0 : i32
    return %arg0, %c0_i32, %c0_i32_0 : i32, i32, i32
  }
  func.func @transform_3(%arg0: i32) -> (i32, i32, i32) {
    %c0_i32 = arith.constant 0 : i32
    %c0_i32_0 = arith.constant 0 : i32
    %c0_i32_1 = arith.constant 0 : i32
    return %arg0, %c0_i32, %c0_i32_0 : i32, i32, i32
  }
}

</mosaic_0001>

<llo_original>
// kernel: softmax_focal_loss.1
$region0: #{softmax_focal_loss.1}
  #allocation0 [shape = 'u32[]', space=smem, size = 0x4, offset = 0x4, fixed_abs, tag = 'smem constant byte address 0x4 - core index']
  #allocation1 [shape = 'u32[144,128]{1,0:T(1,128)}', space=vmem, size = 0x12000, scoped, tag = 'internal scratch']
  %s0 = inlined_call_operand.vmem [shape: f32[2,4,256], index: 0, kind: input, shape index: {}]
  %s1 = inlined_call_operand.vmem [shape: u8[2,1,256], index: 1, kind: input, shape index: {}]
  %s2 = inlined_call_operand.vmem [shape: f32[2,1,128], index: 2, kind: output, shape index: {0}]
  %s3 = inlined_call_operand.vmem [shape: f32[2,1,128], index: 3, kind: output, shape index: {1}]
  %4 = xla_tuple %s2, %s3
  %s5 = sld [smem:[#allocation0]]
  $region124: #{softmax_focal_loss.1} parent=0
    _
  %s7 = ssub.s32 1, %s5
  %s8 = scalar_select 0, %s7, %s5
  $region1: #{softmax_focal_loss.1} parent=0
    #allocation2 [shape = 'u8[8192]{0}', space=vmem, size = 0x2000, scoped, tag = 'input window, operand 0']
    #allocation3 [shape = 'u8[2048]{0}', space=vmem, size = 0x800, scoped, tag = 'input window, operand 1']
    loop: start=0, step=1, limit=4
    $region2: #{softmax_focal_loss.1} parent=1 // loop_pre_header
      _
    $region3: #{softmax_focal_loss.1} parent=1 // loop_header
      %s10 = sphi 0, %s14
      %p11 = scmp.ge.s32.totalorder %s10, 4
      %s20 = sphi 0, %s22
      %s23 = sphi 0, %s20
      %s24 = sphi 0, %s23
      %s40 = sphi 0, %s24
      %s46 = sphi 0, %s48
      %s49 = sphi 0, %s46
      %s50 = sphi 0, %s49
      %s66 = sphi 0, %s50
      %s72 = sphi 0, %s74
      %s75 = sphi 0, %s72
      %s76 = sphi 0, %s75
      %s92 = sphi 0, %s76
      %s98 = sphi 0, %s100
      %s101 = sphi 0, %s98
      %s102 = sphi 0, %s101
      %s118 = sphi 0, %s102
    $region4: #{softmax_focal_loss.1} parent=1 // loop_header_branch
      %13 = sbr.rel (%p11) target = $region8
    $region5: #{softmax_focal_loss.1} parent=1 // loop_body
      %s15 = ssub.s32 %s10, 1
      %s16 = ssub.s32 %s10, 2
      %s17 = sadd.s32 %s10, 1
      %s18 = ssub.s32 %s10, %s17
      %p19 = scmp.eq.s32.totalorder %s18, 0
      %s21 = sadd.s32 %s20, 1
      %s22 = scalar_select %p19, %s20, %s21
      %p25 = pneg %p19
      %p26 = scmp.eq.s32.totalorder %s10, 1
      %p27 = por %p25, %p26
      %p28 = scmp.ne.s32.totalorder %s20, %s23
      %p29 = scmp.eq.s32.totalorder %s10, 0
      %p30 = por %p28, %p29
      %p31 = scmp.ne.s32.totalorder %s20, %s23
      %p32 = scmp.eq.s32.totalorder %s15, 1
      %p33 = por %p31, %p32
      %p34 = scmp.ne.s32.totalorder %s23, %s24
      %p35 = scmp.eq.s32.totalorder %s15, 0
      %p36 = por %p34, %p35
      %p37 = scmp.ne.s32.totalorder %s23, %s24
      %p38 = scmp.eq.s32.totalorder %s16, 1
      %p39 = por %p37, %p38
      %p41 = scmp.ne.s32.totalorder %s24, %s40
      %p42 = scmp.eq.s32.totalorder %s16, 0
      %p43 = por %p41, %p42
      %s44 = ssub.s32 %s10, %s17
      %p45 = scmp.eq.s32.totalorder %s44, 0
      %s47 = sadd.s32 %s46, 1
      %s48 = scalar_select %p45, %s46, %s47
      %p51 = pneg %p45
      %p52 = scmp.eq.s32.totalorder %s10, 1
      %p53 = por %p51, %p52
      %p54 = scmp.ne.s32.totalorder %s46, %s49
      %p55 = scmp.eq.s32.totalorder %s10, 0
      %p56 = por %p54, %p55
      %p57 = scmp.ne.s32.totalorder %s46, %s49
      %p58 = scmp.eq.s32.totalorder %s15, 1
      %p59 = por %p57, %p58
      %p60 = scmp.ne.s32.totalorder %s49, %s50
      %p61 = scmp.eq.s32.totalorder %s15, 0
      %p62 = por %p60, %p61
      %p63 = scmp.ne.s32.totalorder %s49, %s50
      %p64 = scmp.eq.s32.totalorder %s16, 1
      %p65 = por %p63, %p64
      %p67 = scmp.ne.s32.totalorder %s50, %s66
      %p68 = scmp.eq.s32.totalorder %s16, 0
      %p69 = por %p67, %p68
      %s70 = ssub.s32 %s10, %s17
      %p71 = scmp.eq.s32.totalorder %s70, 0
      %s73 = sadd.s32 %s72, 1
      %s74 = scalar_select %p71, %s72, %s73
      %p77 = pneg %p71
      %p78 = scmp.eq.s32.totalorder %s10, 1
      %p79 = por %p77, %p78
      %p80 = scmp.ne.s32.totalorder %s72, %s75
      %p81 = scmp.eq.s32.totalorder %s10, 0
      %p82 = por %p80, %p81
      %p83 = scmp.ne.s32.totalorder %s72, %s75
      %p84 = scmp.eq.s32.totalorder %s15, 1
      %p85 = por %p83, %p84
      %p86 = scmp.ne.s32.totalorder %s75, %s76
      %p87 = scmp.eq.s32.totalorder %s15, 0
      %p88 = por %p86, %p87
      %p89 = scmp.ne.s32.totalorder %s75, %s76
      %p90 = scmp.eq.s32.totalorder %s16, 1
      %p91 = por %p89, %p90
      %p93 = scmp.ne.s32.totalorder %s76, %s92
      %p94 = scmp.eq.s32.totalorder %s16, 0
      %p95 = por %p93, %p94
      %s96 = ssub.s32 %s10, %s17
      %p97 = scmp.eq.s32.totalorder %s96, 0
      %s99 = sadd.s32 %s98, 1
      %s100 = scalar_select %p97, %s98, %s99
      %p103 = pneg %p97
      %p104 = scmp.eq.s32.totalorder %s10, 1
      %p105 = por %p103, %p104
      %p106 = scmp.ne.s32.totalorder %s98, %s101
      %p107 = scmp.eq.s32.totalorder %s10, 0
      %p108 = por %p106, %p107
      %p109 = scmp.ne.s32.totalorder %s98, %s101
      %p110 = scmp.eq.s32.totalorder %s15, 1
      %p111 = por %p109, %p110
      %p112 = scmp.ne.s32.totalorder %s101, %s102
      %p113 = scmp.eq.s32.totalorder %s15, 0
      %p114 = por %p112, %p113
      %p115 = scmp.ne.s32.totalorder %s101, %s102
      %p116 = scmp.eq.s32.totalorder %s16, 1
      %p117 = por %p115, %p116
      %p119 = scmp.ne.s32.totalorder %s102, %s118
      %p120 = scmp.eq.s32.totalorder %s16, 0
      %p121 = por %p119, %p120
      %p122 = scmp.le.s32.totalorder 1, %s10
      %p123 = scmp.lt.s32.totalorder %s10, 3
      %p124 = pnand %p122, %p123
      %p125 = pneg %p124
      // Predicated region
      $region9: #{softmax_focal_loss.1} parent=5 // pred_check
        _
      $region10: #{softmax_focal_loss.1} parent=5 // pred_check_branch
        %127 = sbr.rel (%p124) target = $region12
      $region11: #{softmax_focal_loss.1} parent=5 // pred_region
        %s128 = ssub.s32 %s10, 1
      $region12: #{softmax_focal_loss.1} parent=5 // pred_fallthru
        _
      %p129 = scmp.lt.s32.totalorder %s10, 2
      // Predicated region
      $region13: #{softmax_focal_loss.1} parent=5 // pred_check
        %p130 = pneg %p129
      $region14: #{softmax_focal_loss.1} parent=5 // pred_check_branch
        %132 = sbr.rel (%p130) target = $region16
      $region15: #{softmax_focal_loss.1} parent=5 // pred_region
        // Predicated region
        $region17: #{softmax_focal_loss.1} parent=15 // pred_check
          %p133 = pneg %p30
        $region18: #{softmax_focal_loss.1} parent=15 // pred_check_branch
          %135 = sbr.rel (%p133) target = $region20
        $region19: #{softmax_focal_loss.1} parent=15 // pred_region
          %s136 = sand.u32 %s20, 1
          %s137 = sand.u32 %s20, 1
          %s138 = smul.addr %s137, 8
          %s139 = scalar_lea.vmem [#allocation2], %s138
          %s140 = smul.addr %s10, 4
          %s141 = scalar_lea.vmem %s0, %s140
          // Predicated region
          $region21: #{softmax_focal_loss.1} parent=19 // pred_check
            _
          $region22: #{softmax_focal_loss.1} parent=19 // pred_check_branch
            %143 = sbr.rel (0) target = $region24
          $region23: #{softmax_focal_loss.1} parent=19 // pred_region
            // Predicated region
            $region25: #{softmax_focal_loss.1} parent=23 // pred_check
              _
            $region26: #{softmax_focal_loss.1} parent=23 // pred_check_branch
              %145 = sbr.rel target = $region28
            $region27: #{softmax_focal_loss.1} parent=23 // pred_region
              // Predicated region
              $region40: #{softmax_focal_loss.1} parent=27 // pred_check
                _
              $region41: #{softmax_focal_loss.1} parent=27 // pred_check_branch
                %162 = sbr.rel (0) target = $region43
              $region42: #{softmax_focal_loss.1} parent=27 // pred_region
                loop: start=0, step=1, limit=1
                $region44: #{softmax_focal_loss.1} parent=42 // loop_pre_header
                  _
                $region45: #{softmax_focal_loss.1} parent=42 // loop_header
                  %s164 = sphi 0, %s168
                  %p165 = scmp.ge.s32.totalorder %s164, 1
                  %s169 = sphi %s141, %s141
                  %s170 = sphi %s139, %s139
                $region46: #{softmax_focal_loss.1} parent=42 // loop_header_branch
                  %167 = sbr.rel (%p165) target = $region50
                $region47: #{softmax_focal_loss.1} parent=42 // loop_body
                  _
                $region48: #{softmax_focal_loss.1} parent=42 // loop_footer
                  %s168 = sadd.s32 1, %s164
                $region49: #{softmax_focal_loss.1} parent=42 // loop_footer_branch
                  %163 = sbr.rel target = $region45
                $region50: #{softmax_focal_loss.1} parent=42 // loop_exit
                  _
                loop: start=0, step=1, limit=1
                $region51: #{softmax_focal_loss.1} parent=42 // loop_pre_header
                  _
                $region52: #{softmax_focal_loss.1} parent=42 // loop_header
                  %s173 = sphi 0, %s177
                  %p174 = scmp.ge.s32.totalorder %s173, 1
                  %s178 = sphi %s141, %s141
                  %s179 = sphi %s139, %s139
                $region53: #{softmax_focal_loss.1} parent=42 // loop_header_branch
                  %176 = sbr.rel (%p174) target = $region57
                $region54: #{softmax_focal_loss.1} parent=42 // loop_body
                  %v180 = vld [vmem:[%s178] sm:$0xf]
                  %181 = vst [vmem:[%s179] sm:$0xf] %v180
                  %v182 = vld [vmem:[%s178 + $0x8] sm:$0xf]
                  %183 = vst [vmem:[%s179 + $0x4] sm:$0xf] %v182
                $region55: #{softmax_focal_loss.1} parent=42 // loop_footer
                  %s177 = sadd.s32 1, %s173
                $region56: #{softmax_focal_loss.1} parent=42 // loop_footer_branch
                  %172 = sbr.rel target = $region52
                $region57: #{softmax_focal_loss.1} parent=42 // loop_exit
                  _
              $region43: #{softmax_focal_loss.1} parent=27 // pred_fallthru
                _
            $region28: #{softmax_focal_loss.1} parent=23 // pred_fallthru
              _
            // Predicated region
            $region29: #{softmax_focal_loss.1} parent=23 // pred_check
              _
            $region30: #{softmax_focal_loss.1} parent=23 // pred_check_branch
              %147 = sbr.rel (0) target = $region32
            $region31: #{softmax_focal_loss.1} parent=23 // pred_region
              loop: start=0, step=1, limit=1
              $region33: #{softmax_focal_loss.1} parent=31 // loop_pre_header
                _
              $region34: #{softmax_focal_loss.1} parent=31 // loop_header
                %s150 = sphi 0, %s154
                %p151 = scmp.ge.s32.totalorder %s150, 1
                %s155 = sphi %s141, %s141
                %s156 = sphi %s139, %s139
              $region35: #{softmax_focal_loss.1} parent=31 // loop_header_branch
                %153 = sbr.rel (%p151) target = $region39
              $region36: #{softmax_focal_loss.1} parent=31 // loop_body
                %v157 = vld [vmem:[%s155] sm:$0xf]
                %158 = vst [vmem:[%s156] sm:$0xf] %v157
                %v159 = vld [vmem:[%s155 + $0x8] sm:$0xf]
                %160 = vst [vmem:[%s156 + $0x4] sm:$0xf] %v159
              $region37: #{softmax_focal_loss.1} parent=31 // loop_footer
                %s154 = sadd.s32 1, %s150
              $region38: #{softmax_focal_loss.1} parent=31 // loop_footer_branch
                %149 = sbr.rel target = $region34
              $region39: #{softmax_focal_loss.1} parent=31 // loop_exit
                _
            $region32: #{softmax_focal_loss.1} parent=23 // pred_fallthru
              _
          $region24: #{softmax_focal_loss.1} parent=19 // pred_fallthru
            _
          %184 = vnop
        $region20: #{softmax_focal_loss.1} parent=15 // pred_fallthru
          _
        // Predicated region
        $region58: #{softmax_focal_loss.1} parent=15 // pred_check
          %p185 = pneg %p56
        $region59: #{softmax_focal_loss.1} parent=15 // pred_check_branch
          %187 = sbr.rel (%p185) target = $region61
        $region60: #{softmax_focal_loss.1} parent=15 // pred_region
          %s188 = sand.u32 %s46, 1
          %s189 = sand.u32 %s46, 1
          %s190 = smul.addr %s189, 2
          %s191 = scalar_lea.vmem [#allocation3], %s190
          %s192 = scalar_lea.vmem %s1, %s10
          // Predicated region
          $region62: #{softmax_focal_loss.1} parent=60 // pred_check
            _
          $region63: #{softmax_focal_loss.1} parent=60 // pred_check_branch
            %194 = sbr.rel (0) target = $region65
          $region64: #{softmax_focal_loss.1} parent=60 // pred_region
            // Predicated region
            $region66: #{softmax_focal_loss.1} parent=64 // pred_check
              _
            $region67: #{softmax_focal_loss.1} parent=64 // pred_check_branch
              %196 = sbr.rel target = $region69
            $region68: #{softmax_focal_loss.1} parent=64 // pred_region
              // Predicated region
              $region81: #{softmax_focal_loss.1} parent=68 // pred_check
                _
              $region82: #{softmax_focal_loss.1} parent=68 // pred_check_branch
                %213 = sbr.rel (0) target = $region84
              $region83: #{softmax_focal_loss.1} parent=68 // pred_region
                loop: start=0, step=1, limit=1
                $region85: #{softmax_focal_loss.1} parent=83 // loop_pre_header
                  _
                $region86: #{softmax_focal_loss.1} parent=83 // loop_header
                  %s216 = sphi 0, %s220
                  %p217 = scmp.ge.s32.totalorder %s216, 1
                  %s221 = sphi %s192, %s192
                  %s222 = sphi %s191, %s191
                $region87: #{softmax_focal_loss.1} parent=83 // loop_header_branch
                  %219 = sbr.rel (%p217) target = $region91
                $region88: #{softmax_focal_loss.1} parent=83 // loop_body
                  %v223 = vld [vmem:[%s221] sm:$0x1]
                  %224 = vst [vmem:[%s222] sm:$0x1] %v223
                  %v225 = vld [vmem:[%s221 + $0x2] sm:$0x1]
                  %226 = vst [vmem:[%s222 + $0x1] sm:$0x1] %v225
                $region89: #{softmax_focal_loss.1} parent=83 // loop_footer
                  %s220 = sadd.s32 1, %s216
                $region90: #{softmax_focal_loss.1} parent=83 // loop_footer_branch
                  %215 = sbr.rel target = $region86
                $region91: #{softmax_focal_loss.1} parent=83 // loop_exit
                  _
              $region84: #{softmax_focal_loss.1} parent=68 // pred_fallthru
                _
            $region69: #{softmax_focal_loss.1} parent=64 // pred_fallthru
              _
            // Predicated region
            $region70: #{softmax_focal_loss.1} parent=64 // pred_check
              _
            $region71: #{softmax_focal_loss.1} parent=64 // pred_check_branch
              %198 = sbr.rel (0) target = $region73
            $region72: #{softmax_focal_loss.1} parent=64 // pred_region
              loop: start=0, step=1, limit=1
              $region74: #{softmax_focal_loss.1} parent=72 // loop_pre_header
                _
              $region75: #{softmax_focal_loss.1} parent=72 // loop_header
                %s201 = sphi 0, %s205
                %p202 = scmp.ge.s32.totalorder %s201, 1
                %s206 = sphi %s192, %s192
                %s207 = sphi %s191, %s191
              $region76: #{softmax_focal_loss.1} parent=72 // loop_header_branch
                %204 = sbr.rel (%p202) target = $region80
              $region77: #{softmax_focal_loss.1} parent=72 // loop_body
                %v208 = vld [vmem:[%s206] sm:$0x1]
                %209 = vst [vmem:[%s207] sm:$0x1] %v208
                %v210 = vld [vmem:[%s206 + $0x2] sm:$0x1]
                %211 = vst [vmem:[%s207 + $0x1] sm:$0x1] %v210
              $region78: #{softmax_focal_loss.1} parent=72 // loop_footer
                %s205 = sadd.s32 1, %s201
              $region79: #{softmax_focal_loss.1} parent=72 // loop_footer_branch
                %200 = sbr.rel target = $region75
              $region80: #{softmax_focal_loss.1} parent=72 // loop_exit
                _
            $region73: #{softmax_focal_loss.1} parent=64 // pred_fallthru
              _
          $region65: #{softmax_focal_loss.1} parent=60 // pred_fallthru
            _
          %227 = vnop
        $region61: #{softmax_focal_loss.1} parent=15 // pred_fallthru
          _
      $region16: #{softmax_focal_loss.1} parent=5 // pred_fallthru
        _
      %p228 = scmp.le.s32.totalorder 1, %s10
      %p229 = scmp.lt.s32.totalorder %s10, 3
      %p230 = pnand %p228, %p229
      %p231 = pneg %p230
      // Predicated region
      $region92: #{softmax_focal_loss.1} parent=5 // pred_check
        _
      $region93: #{softmax_focal_loss.1} parent=5 // pred_check_branch
        %233 = sbr.rel (%p230) target = $region95
      $region94: #{softmax_focal_loss.1} parent=5 // pred_region
        %s234 = ssub.s32 %s10, 1
        %s235 = sand.u32 %s23, 1
        %s236 = sand.u32 %s23, 1
        %s237 = smul.addr %s236, 8
        %s238 = scalar_lea.vmem [#allocation2], %s237
        // Predicated region
        $region96: #{softmax_focal_loss.1} parent=94 // pred_check
          %p239 = pneg %p36
        $region97: #{softmax_focal_loss.1} parent=94 // pred_check_branch
          %241 = sbr.rel (%p239) target = $region99
        $region98: #{softmax_focal_loss.1} parent=94 // pred_region
          _
        $region99: #{softmax_focal_loss.1} parent=94 // pred_fallthru
          _
        %s242 = sand.u32 %s49, 1
        %s243 = sand.u32 %s49, 1
        %s244 = smul.addr %s243, 2
        %s245 = scalar_lea.vmem [#allocation3], %s244
        // Predicated region
        $region100: #{softmax_focal_loss.1} parent=94 // pred_check
          %p246 = pneg %p62
        $region101: #{softmax_focal_loss.1} parent=94 // pred_check_branch
          %248 = sbr.rel (%p246) target = $region103
        $region102: #{softmax_focal_loss.1} parent=94 // pred_region
          _
        $region103: #{softmax_focal_loss.1} parent=94 // pred_fallthru
          _
        %s249 = sand.u32 %s23, 1
        %s250 = sand.u32 %s23, 1
        %s251 = smul.addr %s250, 8
        %s252 = scalar_lea.vmem [#allocation2], %s251
        %p253 = pneg %p36
        %p254 = pneg %p33
        %s255 = sand.u32 %s49, 1
        %s256 = sand.u32 %s49, 1
        %s257 = smul.addr %s256, 2
        %s258 = scalar_lea.vmem [#allocation3], %s257
        %p259 = pneg %p62
        %p260 = pneg %p59
        %p261 = pneg %p88
        %p262 = pneg %p85
        %p263 = scmp.lt.s32.totalorder %s15, 1
        %s264 = scalar_select %p263, %s15, 1
        %s265 = scalar_lea.vmem %s2, %s264
        %p266 = pneg %p114
        %p267 = pneg %p111
        %p268 = scmp.lt.s32.totalorder %s15, 1
        %s269 = scalar_select %p268, %s15, 1
        %s270 = scalar_lea.vmem %s3, %s269
        %p271 = scmp.lt.s32.totalorder %s15, 1
        %s272 = scalar_select %p271, %s15, 1
        %s273 = scalar_lea.vmem %s2, %s272
        %p274 = scmp.lt.s32.totalorder %s15, 1
        %s275 = scalar_select %p274, %s15, 1
        %s276 = scalar_lea.vmem %s3, %s275
        %v277 = vld [vmem:[%s238] sm:$0xf]
        %v278 = vld [vmem:[%s238 + $0x4] sm:$0xf]
        %v279 = vld [vmem:[%s245] sm:$0x1]
        %v280 = vld [vmem:[%s245 + $0x1] sm:$0x1]
        %v281 = vunpack.c.0.s8 %v279
        %v282 = vunpack.c.0.s8 %v280
        %v283 = vand.u32 %v281, 255
        %v284 = vand.u32 %v282, 255
        %v285 = vlaneseq
        %v286 = vand.u32 %v285, 127
        %s287 = smul.u32 %s15, 128
        %v288 = vstv %s287
        %v289 = vadd.s32 %v288, %v286
        %vm290 = vcmp.lt.s32.totalorder %v289, 256
        %vm291 = vcmp.ne.s32.totalorder %v283, 255
        %vm292 = vcmp.ne.s32.totalorder %v284, 255
        %vm293 = vmand %vm290, %vm291
        %vm294 = vmand %vm290, %vm292
        %vm295 = vcmask 1043456
        %v296 = vsel %vm295, %v277, -inf
        %v297 = vrot.slane %v296, 4
        %v298 = vmax.f32 %v296, %v297
        %v299 = vrot.slane %v298, 2
        %v300 = vmax.f32 %v298, %v299
        %v301 = vrot.slane %v300, 1
        %v302 = vmax.f32 %v300, %v301
        %v303 = vsel %vm295, %v278, -inf
        %v304 = vrot.slane %v303, 4
        %v305 = vmax.f32 %v303, %v304
        %v306 = vrot.slane %v305, 2
        %v307 = vmax.f32 %v305, %v306
        %v308 = vrot.slane %v307, 1
        %v309 = vmax.f32 %v307, %v308
        %v310 = vsub.f32 %v277, %v302
        %v311 = vsub.f32 %v278, %v309
        %v312 = vmul.f32 %v310, 1.442695
        %v313 = vpow.pop %v312
        %v314 = vmul.f32 %v311, 1.442695
        %v315 = vpow.pop %v314
        %v316 = vsel %vm295, %v313, 0.0
        %v317 = vrot.slane %v316, 4
        %v318 = vadd.f32 %v316, %v317
        %v319 = vrot.slane %v318, 2
        %v320 = vadd.f32 %v318, %v319
        %v321 = vrot.slane %v320, 1
        %v322 = vadd.f32 %v320, %v321
        %v323 = vsel %vm295, %v315, 0.0
        %v324 = vrot.slane %v323, 4
        %v325 = vadd.f32 %v323, %v324
        %v326 = vrot.slane %v325, 2
        %v327 = vadd.f32 %v325, %v326
        %v328 = vrot.slane %v327, 1
        %v329 = vadd.f32 %v327, %v328
        %v330 = vlaneseq
        %v331 = vshrl.u32 %v330, 7
        %vm332 = vcmp.eq.s32.totalorder %v283, 255
        %vm333 = vcmp.eq.s32.totalorder %v284, 255
        %v334 = vsel %vm332, 0, %v283
        %v335 = vsel %vm333, 0, %v284
        %v336 = vlaneseq
        %v337 = vshrl.u32 %v336, 7
        %v338 = vsub.s32 0, %v337
        %v339 = vrot.slane %v334, %v338
        %v340 = vlaneseq
        %v341 = vshrl.u32 %v340, 7
        %v342 = vsub.s32 0, %v341
        %v343 = vrot.slane %v335, %v342
        %vm344 = vcmp.eq.s32.totalorder %v331, %v339
        %vm345 = vcmp.eq.s32.totalorder %v331, %v343
        %v346 = vsel %vm344, %v277, 0.0
        %v347 = vsel %vm345, %v278, 0.0
        %v348 = vsel %vm295, %v346, 0.0
        %v349 = vrot.slane %v348, 4
        %v350 = vadd.f32 %v348, %v349
        %v351 = vrot.slane %v350, 2
        %v352 = vadd.f32 %v350, %v351
        %v353 = vrot.slane %v352, 1
        %v354 = vadd.f32 %v352, %v353
        %v355 = vsel %vm295, %v347, 0.0
        %v356 = vrot.slane %v355, 4
        %v357 = vadd.f32 %v355, %v356
        %v358 = vrot.slane %v357, 2
        %v359 = vadd.f32 %v357, %v358
        %v360 = vrot.slane %v359, 1
        %v361 = vadd.f32 %v359, %v360
        %v362 = vsel %vm344, %v313, 0.0
        %v363 = vsel %vm345, %v315, 0.0
        %v364 = vsel %vm295, %v362, 0.0
        %v365 = vrot.slane %v364, 4
        %v366 = vadd.f32 %v364, %v365
        %v367 = vrot.slane %v366, 2
        %v368 = vadd.f32 %v366, %v367
        %v369 = vrot.slane %v368, 1
        %v370 = vadd.f32 %v368, %v369
        %v371 = vsel %vm295, %v363, 0.0
        %v372 = vrot.slane %v371, 4
        %v373 = vadd.f32 %v371, %v372
        %v374 = vrot.slane %v373, 2
        %v375 = vadd.f32 %v373, %v374
        %v376 = vrot.slane %v375, 1
        %v377 = vadd.f32 %v375, %v376
        %v378 = vsub.f32 %v354, %v302
        %v379 = vsub.f32 %v361, %v309
        %v380 = vlog2.pop %v322
        %v381 = vmul.f32 %v380, 0.6931472
        %v382 = vlog2.pop %v329
        %v383 = vmul.f32 %v382, 0.6931472
        %v384 = vsub.f32 %v378, %v381
        %v385 = vsub.f32 %v379, %v383
        %v386 = vrcp.pop %v322
        %v387 = vrcp.pop %v329
        %v388 = vmul.f32 %v370, %v386
        %v389 = vmul.f32 %v377, %v387
        %v390 = vsub.f32 1.0, %v388
        %v391 = vsub.f32 1.0, %v389
        %v392 = vmax.f32 %v390, 0.0
        %v393 = vmax.f32 %v391, 0.0
        %v394 = vmul.f32 %v392, %v392
        %v395 = vmul.f32 %v393, %v393
        %v396 = vsub.f32 0.0, %v394
        %v397 = vsub.f32 0.0, %v395
        %v398 = vmul.f32 %v396, %v384
        %v399 = vmul.f32 %v397, %v385
        %v400 = vsel %vm293, %v398, 0.0
        %v401 = vsel %vm294, %v399, 0.0
        %vm402 = vcmask 1040384
        %v403 = vsel %vm402, %v400, 0.0
        %v404 = vsel %vm402, %v401, 0.0
        %v405 = vadd.f32 %v403, %v404
        %v406 = vsel %vm402, %v405, 0.0
        %407 = vadd.xlane.f32.xlu0 %v406
        %v408 = vpop.xlane.xlu0 %407
        %v409 = vsel %vm293, 1, 0
        %v410 = vsel %vm294, 1, 0
        %v411 = vcvt.s32.f32 %v409
        %v412 = vcvt.s32.f32 %v410
        %v413 = vsel %vm402, %v411, 0.0
        %v414 = vsel %vm402, %v412, 0.0
        %v415 = vadd.f32 %v413, %v414
        %v416 = vsel %vm402, %v415, 0.0
        %417 = vadd.xlane.f32.xlu0 %v416
        %v418 = vpop.xlane.xlu0 %417
        %419 = vst [vmem:[%s273] sm:$0x1] %v408
        %420 = vst [vmem:[%s276] sm:$0x1] %v418
        %p421 = scmp.lt.s32.totalorder %s15, 1
        %s422 = scalar_select %p421, %s15, 1
        %s423 = scalar_lea.vmem %s2, %s422
        %p424 = scmp.lt.s32.totalorder %s15, 1
        %s425 = scalar_select %p424, %s15, 1
        %s426 = scalar_lea.vmem %s3, %s425
        // Predicated region
        $region104: #{softmax_focal_loss.1} parent=94 // pred_check
          %p427 = pneg %p85
        $region105: #{softmax_focal_loss.1} parent=94 // pred_check_branch
          %429 = sbr.rel (%p427) target = $region107
        $region106: #{softmax_focal_loss.1} parent=94 // pred_region
          _
        $region107: #{softmax_focal_loss.1} parent=94 // pred_fallthru
          _
        // Predicated region
        $region108: #{softmax_focal_loss.1} parent=94 // pred_check
          %p430 = pneg %p111
        $region109: #{softmax_focal_loss.1} parent=94 // pred_check_branch
          %432 = sbr.rel (%p430) target = $region111
        $region110: #{softmax_focal_loss.1} parent=94 // pred_region
          _
        $region111: #{softmax_focal_loss.1} parent=94 // pred_fallthru
          _
      $region95: #{softmax_focal_loss.1} parent=5 // pred_fallthru
        _
      %p433 = scmp.le.s32.totalorder 2, %s10
      // Predicated region
      $region112: #{softmax_focal_loss.1} parent=5 // pred_check
        %p434 = pneg %p433
      $region113: #{softmax_focal_loss.1} parent=5 // pred_check_branch
        %436 = sbr.rel (%p434) target = $region115
      $region114: #{softmax_focal_loss.1} parent=5 // pred_region
        %s437 = ssub.s32 %s10, 2
        // Predicated region
        $region116: #{softmax_focal_loss.1} parent=114 // pred_check
          %p438 = pneg %p91
        $region117: #{softmax_focal_loss.1} parent=114 // pred_check_branch
          %440 = sbr.rel (%p438) target = $region119
        $region118: #{softmax_focal_loss.1} parent=114 // pred_region
          %p441 = scmp.lt.s32.totalorder %s16, 1
          %s442 = scalar_select %p441, %s16, 1
          %s443 = scalar_lea.vmem %s2, %s442
        $region119: #{softmax_focal_loss.1} parent=114 // pred_fallthru
          _
        // Predicated region
        $region120: #{softmax_focal_loss.1} parent=114 // pred_check
          %p444 = pneg %p117
        $region121: #{softmax_focal_loss.1} parent=114 // pred_check_branch
          %446 = sbr.rel (%p444) target = $region123
        $region122: #{softmax_focal_loss.1} parent=114 // pred_region
          %p447 = scmp.lt.s32.totalorder %s16, 1
          %s448 = scalar_select %p447, %s16, 1
          %s449 = scalar_lea.vmem %s3, %s448
        $region123: #{softmax_focal_loss.1} parent=114 // pred_fallthru
          _
      $region115: #{softmax_focal_loss.1} parent=5 // pred_fallthru
        _
    $region6: #{softmax_focal_loss.1} parent=1 // loop_footer
      %s14 = sadd.s32 1, %s10
    $region7: #{softmax_focal_loss.1} parent=1 // loop_footer_branch
      %9 = sbr.rel target = $region3
    $region8: #{softmax_focal_loss.1} parent=1 // loop_exit
      _

</llo_original>
